<compile_context>
chip_gen: v7x
topology: tpu7x:2x2x1
jax: 0.10.0
libtpu: 0.0.40
codegen_flags: <defaults>
</compile_context>

<pallas_src>
import functools

import jax
import jax.numpy as jnp
from jax.experimental import pallas as pl
from jax.experimental.pallas import tpu as pltpu


_DEFAULT_VMEM_CAP = 64 << 20   # conservative: exact on v7x, lower bound on v5e/v6e
_VMEM_HEADROOM = 12 << 20      # compiler-internal scratch / misc headroom


def _vmem_capacity_bytes():
    """Per-core VMEM capacity, generation-aware with a conservative fallback."""
    try:
        info = pltpu.get_tpu_info()
        cap = int(getattr(info, "vmem_capacity_bytes", 0) or 0)
        if cap > 0:
            return cap
    except Exception:
        pass
    return _DEFAULT_VMEM_CAP


def _se_kernel(x_ref, w1t_ref, w2t_ref, o_ref, *, inv_t):
    # x_ref:   (tb, C, Tp)  one batch tile, native dtype (Tp = T padded to 128)
    # w1t_ref: (C,  C//r)   fc[0].weight, pre-transposed + pre-cast to f32
    # w2t_ref: (C//r, C)    fc[2].weight, pre-transposed + pre-cast to f32
    x = x_ref[...]

    # Squeeze: AdaptiveAvgPool1d(1) == mean over the true T (zero padding
    # contributes nothing to the sum); accumulate in f32.
    y = jnp.sum(x, axis=-1, dtype=jnp.float32) * inv_t              # (tb, C)

    # Excite: Linear(C -> C//r, bias=False) -> Swish -> Linear -> Sigmoid.
    h = jnp.dot(y, w1t_ref[...], preferred_element_type=jnp.float32)
    h = h * jax.nn.sigmoid(h)                                        # Swish
    s = jax.nn.sigmoid(jnp.dot(h, w2t_ref[...],
                               preferred_element_type=jnp.float32))  # (tb, C)

    # Scale: keep x native (bf16 stays bf16); cast the tiny gate down instead.
    o_ref[...] = x * s.astype(x.dtype)[:, :, None]


def _scale_kernel(x_ref, s_ref, o_ref):
    # Pure streaming scale pass over a flat (rows, T) view; s is (rows, 1).
    o_ref[...] = x_ref[...] * s_ref[...]


def _se_fused(xp, w1t, w2t, t_true, batch_tile, tile_budget, cap, w_bytes,
              row_bytes):
    b, c, tp = xp.shape
    tb = min(b, max(1, tile_budget // row_bytes))
    if batch_tile is not None:
        # Clamp a user-supplied tile against the per-chip budget too.
        tb = max(1, min(tb, int(batch_tile)))
    # Keep >=2 grid steps so both TensorCores get work on dual-core chips
    # (harmless on single-core chips at multi-MiB tile sizes).
    if b >= 2:
        tb = min(tb, pl.cdiv(b, 2))
    # Prefer a tile that divides B (no padded remainder step), without
    # shrinking the tile by more than ~2x.
    for d in range(tb, max(tb // 2, 1) - 1, -1):
        if b % d == 0:
            tb = d
            break

    block_bytes = tb * row_bytes
    vmem_limit = int(min(cap, max(32 << 20,
                                  4 * block_bytes + 2 * w_bytes + _VMEM_HEADROOM)))

    kernel = functools.partial(_se_kernel, inv_t=1.0 / float(t_true))
    return pl.pallas_call(
        kernel,
        out_shape=jax.ShapeDtypeStruct((b, c, tp), xp.dtype),
        grid=(pl.cdiv(b, tb),),
        in_specs=[
            pl.BlockSpec((tb, c, tp), lambda i: (i, 0, 0)),
            # Tiny weights: whole-array blocks with constant index_map stay
            # VMEM-resident across grid steps.
            pl.BlockSpec(w1t.shape, lambda i: (0, 0)),
            pl.BlockSpec(w2t.shape, lambda i: (0, 0)),
        ],
        out_specs=pl.BlockSpec((tb, c, tp), lambda i: (i, 0, 0)),
        compiler_params=pltpu.CompilerParams(
            dimension_semantics=("parallel",),
            vmem_limit_bytes=vmem_limit,
        ),
    )(xp, w1t, w2t)


def _se_scale_fallback(xp, w1t, w2t, t_true, tile_budget, cap):
    # Shapes where one batch row (C*Tp) no longer fits the VMEM tile budget:
    # compute the (B, C) gates with plain XLA (tiny reduce + GEMMs) and keep
    # the dominant 2*B*C*T HBM traffic in a lane-dense streaming scale kernel
    # tiled over a flat (B*C, Tp) 2-D view (dense vregs for any dtype / C).
    b, c, tp = xp.shape
    itemsize = xp.dtype.itemsize

    y = jnp.sum(xp.astype(jnp.float32), axis=-1) * (1.0 / float(t_true))  # (B, C)
    h = y @ w1t
    h = h * jax.nn.sigmoid(h)
    s = jax.nn.sigmoid(h @ w2t).astype(xp.dtype)                          # (B, C)

    rows = b * c
    xf = xp.reshape(rows, tp)
    sf = s.reshape(rows, 1)

    tr = rows if rows <= 256 else 256                  # multiple of 8, or full dim
    tt = max(128, min(tp, (tile_budget // max(tr * itemsize, 1)) // 128 * 128))
    tt = min(tt, tp)

    block_bytes = tr * tt * itemsize
    vmem_limit = int(min(cap, max(32 << 20, 4 * block_bytes + _VMEM_HEADROOM)))

    out = pl.pallas_call(
        _scale_kernel,
        out_shape=jax.ShapeDtypeStruct((rows, tp), xp.dtype),
        grid=(pl.cdiv(rows, tr), pl.cdiv(tp, tt)),
        in_specs=[
            pl.BlockSpec((tr, tt), lambda i, j: (i, j)),
            pl.BlockSpec((tr, 1), lambda i, j: (i, 0)),
        ],
        out_specs=pl.BlockSpec((tr, tt), lambda i, j: (i, j)),
        compiler_params=pltpu.CompilerParams(
            dimension_semantics=("parallel", "parallel"),
            vmem_limit_bytes=vmem_limit,
        ),
    )(xf, sf)
    return out.reshape(b, c, tp)


def se_layer(x, w1, w2, *, batch_tile=None, force_scale_fallback=False):
    """SELayer forward.

    x:  (B, C, T)
    w1: (C//r, C)  -- nn.Linear(channel, channel//reduction, bias=False).weight
    w2: (C, C//r)  -- nn.Linear(channel//reduction, channel, bias=False).weight
    """
    b, c, t = x.shape
    itemsize = x.dtype.itemsize

    # One-time layout/dtype plumbing in the wrapper: transposed + f32 weights,
    # so the kernel does plain row-major dots with no per-step transposes/casts.
    w1t = jnp.transpose(w1).astype(jnp.float32)     # (C, C//r)
    w2t = jnp.transpose(w2).astype(jnp.float32)     # (C//r, C)
    w_bytes = int(w1t.size * 4 + w2t.size * 4)

    # Pad T up to a lane-dense multiple of 128 (crop after); the mean inside
    # the kernels divides by the true T so zero padding is exact.
    tp = ((t + 127) // 128) * 128
    xp = x if tp == t else jnp.pad(x, ((0, 0), (0, 0), (0, tp - t)))

    cap = _vmem_capacity_bytes()
    # x and out each double-buffer -> VMEM ~= 4 * tile + weights + headroom.
    tile_budget = max(1 << 20, (cap - _VMEM_HEADROOM - 2 * w_bytes) // 4)

    row_bytes = c * tp * itemsize                   # one batch element's slab
    if force_scale_fallback or row_bytes > tile_budget:
        out = _se_scale_fallback(xp, w1t, w2t, t, tile_budget, cap)
    else:
        out = _se_fused(xp, w1t, w2t, t, batch_tile, tile_budget, cap,
                        w_bytes, row_bytes)
    return out if tp == t else out[..., :t]


def se_layer_ref(x, w1, w2):
    # Pure-JAX reference mirroring the PyTorch forward.
    y = jnp.mean(x.astype(jnp.float32), axis=-1)
    h = y @ w1.T.astype(jnp.float32)
    h = h * jax.nn.sigmoid(h)
    s = jax.nn.sigmoid(h @ w2.T.astype(jnp.float32))
    return (x * s.astype(x.dtype)[:, :, None]).astype(x.dtype)


if __name__ == "__main__":
    channel, reduction = 8, 2
    b, t = 4, 128  # T multiple of 128 -> lane-dense stores, no padding needed

    key = jax.random.PRNGKey(0)
    kx, k1, k2, kx2 = jax.random.split(key, 4)

    x = jax.random.normal(kx, (b, channel, t), dtype=jnp.float32)
    # Deterministic synthetic weights (shapes match nn.Linear .weight layout).
    w1 = jax.random.normal(k1, (channel // reduction, channel),
                           dtype=jnp.float32) * 0.1
    w2 = jax.random.normal(k2, (channel, channel // reduction),
                           dtype=jnp.float32) * 0.1

    ref = se_layer_ref(x, w1, w2)

    # Auto-sized batch tile (clamped to >=2 grid steps -> pipelined path).
    out = jax.block_until_ready(se_layer(x, w1, w2))
    assert jnp.allclose(out, ref, atol=1e-5, rtol=1e-5), "mismatch (auto tile)"

    # Ragged T exercises the wrapper-side lane padding; batch_tile forces the
    # user-tile clamping path.
    t2 = 96
    x2 = jax.random.normal(kx2, (b, channel, t2), dtype=jnp.float32)
    ref2 = se_layer_ref(x2, w1, w2)
    out2 = jax.block_until_ready(se_layer(x2, w1, w2, batch_tile=2))
    assert jnp.allclose(out2, ref2, atol=1e-5, rtol=1e-5), "mismatch (padded T)"

    # Fallback path: XLA-computed gates + lane-dense streaming scale kernel.
    out3 = jax.block_until_ready(se_layer(x, w1, w2, force_scale_fallback=True))
    assert jnp.allclose(out3, ref, atol=1e-5, rtol=1e-5), "mismatch (fallback)"

    print("KERNEL_OK")
</pallas_src>

<mosaic_0001>
module attributes {stable_mosaic.version = 11 : i64} {
  func.func @_se_kernel(%arg0: i32, %arg1: memref<2x8x128xf32, #tpu.memory_space<vmem>>, %arg2: memref<8x4xf32, #tpu.memory_space<vmem>>, %arg3: memref<4x8xf32, #tpu.memory_space<vmem>>, %arg4: memref<2x8x128xf32, #tpu.memory_space<vmem>>) attributes {dimension_semantics = [#tpu.dimension_semantics<parallel>], iteration_bounds = array<i64: 2>, scalar_prefetch = 0 : i64, scratch_operands = 0 : i64, tpu.core_type = #tpu.core_type<tc>, window_params = [{transform_indices = @transform_0, window_bounds = array<i64: 2, 8, 128>}, {pipeline_mode = #tpu.pipeline_mode<synchronous>, transform_indices = @transform_1, window_bounds = array<i64: 8, 4>}, {pipeline_mode = #tpu.pipeline_mode<synchronous>, transform_indices = @transform_2, window_bounds = array<i64: 4, 8>}, {transform_indices = @transform_3, window_bounds = array<i64: 2, 8, 128>}]} {
    %c0 = arith.constant 0 : index
    %c0_0 = arith.constant 0 : index
    %c0_1 = arith.constant 0 : index
    %0 = vector.load %arg1[%c0, %c0_0, %c0_1] : memref<2x8x128xf32, #tpu.memory_space<vmem>>, vector<2x8x128xf32>
    %cst = arith.constant dense<0.000000e+00> : vector<2x8xf32>
    %1 = vector.multi_reduction <add>, %0, %cst [2] : vector<2x8x128xf32> to vector<2x8xf32>
    %cst_2 = arith.constant 7.812500e-03 : f32
    %2 = vector.broadcast %cst_2 : f32 to vector<2x8xf32>
    %3 = arith.mulf %1, %2 : vector<2x8xf32>
    %c0_3 = arith.constant 0 : index
    %c0_4 = arith.constant 0 : index
    %4 = vector.load %arg2[%c0_3, %c0_4] : memref<8x4xf32, #tpu.memory_space<vmem>>, vector<8x4xf32>
    %cst_5 = arith.constant dense<0.000000e+00> : vector<2x4xf32>
    %5 = tpu.matmul %3, %4, %cst_5 {dimension_numbers = #tpu.dot_dimension_numbers<[1], [0], [0], [1], [0, 0, 1, 1], [], []>} : vector<2x8xf32>, vector<8x4xf32>, vector<2x4xf32> -> vector<2x4xf32>
    %6 = arith.negf %5 : vector<2x4xf32>
    %7 = math.exp %6 : vector<2x4xf32>
    %cst_6 = arith.constant 1.000000e+00 : f32
    %8 = vector.broadcast %cst_6 : f32 to vector<2x4xf32>
    %9 = arith.addf %8, %7 : vector<2x4xf32>
    %10 = arith.divf %8, %9 : vector<2x4xf32>
    %11 = arith.mulf %5, %10 : vector<2x4xf32>
    %c0_7 = arith.constant 0 : index
    %c0_8 = arith.constant 0 : index
    %12 = vector.load %arg3[%c0_7, %c0_8] : memref<4x8xf32, #tpu.memory_space<vmem>>, vector<4x8xf32>
    %cst_9 = arith.constant dense<0.000000e+00> : vector<2x8xf32>
    %13 = tpu.matmul %11, %12, %cst_9 {dimension_numbers = #tpu.dot_dimension_numbers<[1], [0], [0], [1], [0, 0, 1, 1], [], []>} : vector<2x4xf32>, vector<4x8xf32>, vector<2x8xf32> -> vector<2x8xf32>
    %14 = arith.negf %13 : vector<2x8xf32>
    %15 = math.exp %14 : vector<2x8xf32>
    %cst_10 = arith.constant 1.000000e+00 : f32
    %16 = vector.broadcast %cst_10 : f32 to vector<2x8xf32>
    %17 = arith.addf %16, %15 : vector<2x8xf32>
    %18 = arith.divf %16, %17 : vector<2x8xf32>
    %19 = vector.shape_cast %18 : vector<2x8xf32> to vector<2x8x1xf32>
    %20 = vector.broadcast %19 : vector<2x8x1xf32> to vector<2x8x128xf32>
    %21 = arith.mulf %0, %20 : vector<2x8x128xf32>
    %c0_11 = arith.constant 0 : index
    %c0_12 = arith.constant 0 : index
    %c0_13 = arith.constant 0 : index
    %22 = vector.load %arg4[%c0_11, %c0_12, %c0_13] : memref<2x8x128xf32, #tpu.memory_space<vmem>>, vector<2x8x128xf32>
    tpu.vector_store %arg4[%c0_11, %c0_12, %c0_13], %21 {strides = array<i32>} : memref<2x8x128xf32, #tpu.memory_space<vmem>>, vector<2x8x128xf32>,
    return
  }
  func.func @transform_0(%arg0: i32) -> (i32, i32, i32) {
    %c0_i32 = arith.constant 0 : i32
    %c0_i32_0 = arith.constant 0 : i32
    %c0_i32_1 = arith.constant 0 : i32
    return %arg0, %c0_i32, %c0_i32_0 : i32, i32, i32
  }
  func.func @transform_1(%arg0: i32) -> (i32, i32) {
    %c0_i32 = arith.constant 0 : i32
    %c0_i32_0 = arith.constant 0 : i32
    %c0_i32_1 = arith.constant 0 : i32
    return %c0_i32, %c0_i32_0 : i32, i32
  }
  func.func @transform_2(%arg0: i32) -> (i32, i32) {
    %c0_i32 = arith.constant 0 : i32
    %c0_i32_0 = arith.constant 0 : i32
    %c0_i32_1 = arith.constant 0 : i32
    return %c0_i32, %c0_i32_0 : i32, i32
  }
  func.func @transform_3(%arg0: i32) -> (i32, i32, i32) {
    %c0_i32 = arith.constant 0 : i32
    %c0_i32_0 = arith.constant 0 : i32
    %c0_i32_1 = arith.constant 0 : i32
    return %arg0, %c0_i32, %c0_i32_0 : i32, i32, i32
  }
}

</mosaic_0001>

<llo_original>
// kernel: tpu_custom_call.1
$region0: #{tpu_custom_call.1}
  #allocation0 [shape = 'u32[]', space=smem, size = 0x4, offset = 0x4, fixed_abs, tag = 'smem constant byte address 0x4 - core index']
  #allocation1 [shape = 'u32[144,128]{1,0:T(1,128)}', space=vmem, size = 0x12000, scoped, tag = 'internal scratch']
  %s0 = inlined_call_operand.hbm [shape: f32[4,8,128], index: 0, kind: input, shape index: {}]
  %s1 = inlined_call_operand.vmem [shape: f32[8,4], index: 1, kind: input, shape index: {}]
  %s2 = inlined_call_operand.vmem [shape: f32[4,8], index: 2, kind: input, shape index: {}]
  %s3 = inlined_call_operand.hbm [shape: f32[4,8,128], index: 3, kind: output, shape index: {}]
  %s4 = sld [smem:[#allocation0]]
  $region49: #{tpu_custom_call.1} parent=0
    _
  %s6 = ssub.s32 1, %s4
  %s7 = scalar_select 0, %s6, %s4
  $region1: #{tpu_custom_call.1} parent=0
    #allocation2 [shape = 'u8[16384]{0}', space=vmem, size = 0x4000, scoped, tag = 'input window, operand 0']
    #allocation3 [shape = 's32[2]{0}', space=sflag, size = 0x8, scoped, tag = 'scoped memory for tpu_custom_call.1']
    #allocation4 [shape = 's32[2]{0}', space=sflag, size = 0x8, scoped, tag = 'scoped memory for tpu_custom_call.1']
    #allocation5 [shape = 'u8[16384]{0}', space=vmem, size = 0x4000, scoped, tag = 'output window, operand 0']
    %8 = vsyncpa [#allocation3], 0
    %s9 = scalar_lea.sflag [#allocation3], 1
    %10 = vsyncpa %s9, 0
    %11 = vsyncpa [#allocation4], 0
    %s12 = scalar_lea.sflag [#allocation4], 1
    %13 = vsyncpa %s12, 0
    loop: start=0, step=1, limit=4
    $region2: #{tpu_custom_call.1} parent=1 // loop_pre_header
      _
    $region3: #{tpu_custom_call.1} parent=1 // loop_header
      %s15 = sphi 0, %s19
      %p16 = scmp.ge.s32.totalorder %s15, 4
      %s25 = sphi 0, %s27
      %s28 = sphi 0, %s25
      %s29 = sphi 0, %s28
      %s45 = sphi 0, %s29
      %s49 = sphi 0, %s49
      %s51 = sphi 0, %s49
      %s52 = sphi 0, %s51
      %s66 = sphi 0, %s52
      %s70 = sphi 0, %s70
      %s72 = sphi 0, %s70
      %s73 = sphi 0, %s72
      %s87 = sphi 0, %s73
      %s93 = sphi 0, %s95
      %s96 = sphi 0, %s93
      %s97 = sphi 0, %s96
      %s113 = sphi 0, %s97
    $region4: #{tpu_custom_call.1} parent=1 // loop_header_branch
      %18 = sbr.rel (%p16) target = $region8
    $region5: #{tpu_custom_call.1} parent=1 // loop_body
      %s20 = ssub.s32 %s15, 1
      %s21 = ssub.s32 %s15, 2
      %s22 = sadd.s32 %s15, 1
      %s23 = ssub.s32 %s15, %s22
      %p24 = scmp.eq.s32.totalorder %s23, 0
      %s26 = sadd.s32 %s25, 1
      %s27 = scalar_select %p24, %s25, %s26
      %p30 = pneg %p24
      %p31 = scmp.eq.s32.totalorder %s15, 1
      %p32 = por %p30, %p31
      %p33 = scmp.ne.s32.totalorder %s25, %s28
      %p34 = scmp.eq.s32.totalorder %s15, 0
      %p35 = por %p33, %p34
      %p36 = scmp.ne.s32.totalorder %s25, %s28
      %p37 = scmp.eq.s32.totalorder %s20, 1
      %p38 = por %p36, %p37
      %p39 = scmp.ne.s32.totalorder %s28, %s29
      %p40 = scmp.eq.s32.totalorder %s20, 0
      %p41 = por %p39, %p40
      %p42 = scmp.ne.s32.totalorder %s28, %s29
      %p43 = scmp.eq.s32.totalorder %s21, 1
      %p44 = por %p42, %p43
      %p46 = scmp.ne.s32.totalorder %s29, %s45
      %p47 = scmp.eq.s32.totalorder %s21, 0
      %p48 = por %p46, %p47
      %s50 = sadd.s32 %s49, 1
      %p53 = scmp.eq.s32.totalorder %s15, 1
      %p54 = scmp.ne.s32.totalorder %s49, %s51
      %p55 = scmp.eq.s32.totalorder %s15, 0
      %p56 = por %p54, %p55
      %p57 = scmp.ne.s32.totalorder %s49, %s51
      %p58 = scmp.eq.s32.totalorder %s20, 1
      %p59 = por %p57, %p58
      %p60 = scmp.ne.s32.totalorder %s51, %s52
      %p61 = scmp.eq.s32.totalorder %s20, 0
      %p62 = por %p60, %p61
      %p63 = scmp.ne.s32.totalorder %s51, %s52
      %p64 = scmp.eq.s32.totalorder %s21, 1
      %p65 = por %p63, %p64
      %p67 = scmp.ne.s32.totalorder %s52, %s66
      %p68 = scmp.eq.s32.totalorder %s21, 0
      %p69 = por %p67, %p68
      %s71 = sadd.s32 %s70, 1
      %p74 = scmp.eq.s32.totalorder %s15, 1
      %p75 = scmp.ne.s32.totalorder %s70, %s72
      %p76 = scmp.eq.s32.totalorder %s15, 0
      %p77 = por %p75, %p76
      %p78 = scmp.ne.s32.totalorder %s70, %s72
      %p79 = scmp.eq.s32.totalorder %s20, 1
      %p80 = por %p78, %p79
      %p81 = scmp.ne.s32.totalorder %s72, %s73
      %p82 = scmp.eq.s32.totalorder %s20, 0
      %p83 = por %p81, %p82
      %p84 = scmp.ne.s32.totalorder %s72, %s73
      %p85 = scmp.eq.s32.totalorder %s21, 1
      %p86 = por %p84, %p85
      %p88 = scmp.ne.s32.totalorder %s73, %s87
      %p89 = scmp.eq.s32.totalorder %s21, 0
      %p90 = por %p88, %p89
      %s91 = ssub.s32 %s15, %s22
      %p92 = scmp.eq.s32.totalorder %s91, 0
      %s94 = sadd.s32 %s93, 1
      %s95 = scalar_select %p92, %s93, %s94
      %p98 = pneg %p92
      %p99 = scmp.eq.s32.totalorder %s15, 1
      %p100 = por %p98, %p99
      %p101 = scmp.ne.s32.totalorder %s93, %s96
      %p102 = scmp.eq.s32.totalorder %s15, 0
      %p103 = por %p101, %p102
      %p104 = scmp.ne.s32.totalorder %s93, %s96
      %p105 = scmp.eq.s32.totalorder %s20, 1
      %p106 = por %p104, %p105
      %p107 = scmp.ne.s32.totalorder %s96, %s97
      %p108 = scmp.eq.s32.totalorder %s20, 0
      %p109 = por %p107, %p108
      %p110 = scmp.ne.s32.totalorder %s96, %s97
      %p111 = scmp.eq.s32.totalorder %s21, 1
      %p112 = por %p110, %p111
      %p114 = scmp.ne.s32.totalorder %s97, %s113
      %p115 = scmp.eq.s32.totalorder %s21, 0
      %p116 = por %p114, %p115
      %p117 = scmp.le.s32.totalorder 1, %s15
      %p118 = scmp.lt.s32.totalorder %s15, 3
      %p119 = pnand %p117, %p118
      %p120 = pneg %p119
      // Predicated region
      $region9: #{tpu_custom_call.1} parent=5 // pred_check
        _
      $region10: #{tpu_custom_call.1} parent=5 // pred_check_branch
        %122 = sbr.rel (%p119) target = $region12
      $region11: #{tpu_custom_call.1} parent=5 // pred_region
        %s123 = ssub.s32 %s15, 1
        // Predicated region
        $region13: #{tpu_custom_call.1} parent=11 // pred_check
          %p124 = pneg %p62
        $region14: #{tpu_custom_call.1} parent=11 // pred_check_branch
          %126 = sbr.rel (%p124) target = $region16
        $region15: #{tpu_custom_call.1} parent=11 // pred_region
          _
        $region16: #{tpu_custom_call.1} parent=11 // pred_fallthru
          _
        // Predicated region
        $region17: #{tpu_custom_call.1} parent=11 // pred_check
          %p127 = pneg %p83
        $region18: #{tpu_custom_call.1} parent=11 // pred_check_branch
          %129 = sbr.rel (%p127) target = $region20
        $region19: #{tpu_custom_call.1} parent=11 // pred_region
          _
        $region20: #{tpu_custom_call.1} parent=11 // pred_fallthru
          _
      $region12: #{tpu_custom_call.1} parent=5 // pred_fallthru
        _
      %p130 = scmp.lt.s32.totalorder %s15, 2
      // Predicated region
      $region21: #{tpu_custom_call.1} parent=5 // pred_check
        %p131 = pneg %p130
      $region22: #{tpu_custom_call.1} parent=5 // pred_check_branch
        %133 = sbr.rel (%p131) target = $region24
      $region23: #{tpu_custom_call.1} parent=5 // pred_region
        // Predicated region
        $region25: #{tpu_custom_call.1} parent=23 // pred_check
          %p134 = pneg %p35
        $region26: #{tpu_custom_call.1} parent=23 // pred_check_branch
          %136 = sbr.rel (%p134) target = $region28
        $region27: #{tpu_custom_call.1} parent=23 // pred_region
          %s137 = sand.u32 %s25, 1
          %s138 = scalar_lea.sflag [#allocation3], %s137
          %s139 = sand.u32 %s25, 1
          %s140 = smul.addr %s139, 16
          %s141 = scalar_lea.vmem [#allocation2], %s140
          %s142 = smul.u32 2, %s15
          %s144 = ssub.s32 256, 256
          %145 = vsyncadd %s138, %s144
          %s146 = smul.addr %s142, 128
          %s147 = scalar_lea.hbm %s0, %s146
          %s148 = sshll.u32 %s141, 4
          %s149 = int_to_ptr.vmem [resolvable:$true] %s148
          %154 = dma.hbm_to_vmem [thread:$0]  %s147, 256, %s149, %s138, 128, 128, 8
        $region28: #{tpu_custom_call.1} parent=23 // pred_fallthru
          _
      $region24: #{tpu_custom_call.1} parent=5 // pred_fallthru
        _
      %p155 = scmp.le.s32.totalorder 1, %s15
      %p156 = scmp.lt.s32.totalorder %s15, 3
      %p157 = pnand %p155, %p156
      %p158 = pneg %p157
      // Predicated region
      $region29: #{tpu_custom_call.1} parent=5 // pred_check
        _
      $region30: #{tpu_custom_call.1} parent=5 // pred_check_branch
        %160 = sbr.rel (%p157) target = $region32
      $region31: #{tpu_custom_call.1} parent=5 // pred_region
        %s161 = ssub.s32 %s15, 1
        %s162 = sand.u32 %s28, 1
        %s163 = scalar_lea.sflag [#allocation3], %s162
        %s164 = sand.u32 %s28, 1
        %s165 = smul.addr %s164, 16
        %s166 = scalar_lea.vmem [#allocation2], %s165
        // Predicated region
        $region33: #{tpu_custom_call.1} parent=31 // pred_check
          %p167 = pneg %p41
        $region34: #{tpu_custom_call.1} parent=31 // pred_check_branch
          %169 = sbr.rel (%p167) target = $region36
        $region35: #{tpu_custom_call.1} parent=31 // pred_region
          %170 = dma.done %s163, 256
        $region36: #{tpu_custom_call.1} parent=31 // pred_fallthru
          _
        %s171 = sand.u32 %s28, 1
        %s172 = scalar_lea.sflag [#allocation3], %s171
        %s173 = sand.u32 %s28, 1
        %s174 = smul.addr %s173, 16
        %s175 = scalar_lea.vmem [#allocation2], %s174
        %p176 = pneg %p41
        %p177 = pneg %p38
        %p178 = pneg %p62
        %p179 = pneg %p59
        %p180 = pneg %p83
        %p181 = pneg %p80
        %p182 = pneg %p109
        %p183 = pneg %p106
        %s184 = sand.u32 %s96, 1
        %s185 = scalar_lea.sflag [#allocation4], %s184
        %s186 = sand.u32 %s96, 1
        %s187 = smul.addr %s186, 16
        %s188 = scalar_lea.vmem [#allocation5], %s187
        %s189 = smul.u32 2, %s20
        %s190 = smul.u32 2, %s20
        %v191 = vld [vmem:[%s166] sm:$0xff]
        %v192 = vld [vmem:[%s166 + $0x8] sm:$0xff]
        %193 = vadd.xlane.f32.xlu0 %v191
        %v194 = vpop.xlane.xlu0 %193
        %195 = vadd.xlane.f32.xlu0 %v192
        %v196 = vpop.xlane.xlu0 %195
        %v197 = vmul.f32 %v194, 0.0078125
        %v198 = vmul.f32 %v196, 0.0078125
        %v199 = vld [vmem:[%s1] sm:$0xff]
        %v202 = vlaneseq
        %v203 = vand.u32 %v202, 127
        %v204 = vlaneseq
        %v205 = vshrl.u32 %v204, 7
        %v206 = vsub.s32 %v203, %v205
        %v207 = vrot.slane %v197, %v206
        %v208 = vlaneseq
        %v209 = vshrl.u32 %v208, 7
        %v210 = vsub.s32 %v203, %v209
        %v211 = vrot.slane %v198, %v210
        %vm212 = vcmask 1041409
        %v213 = vsel %vm212, %v211, %v207
        %vm214 = vcmask 64512
        %v215 = vsel %vm214, %v213, 0
        %217 = vmatprep.subr.mxu0 0.0
        %218 = vmatpush1.msra.mxu0 %v199
        %219 = vmatprep.subr.mxu0 0.0
        %220 = vmatpush1.msra.mxu0 0.0
        %221 = vmatprep.subr.mxu0 0.0
        %222 = vmatpush1.msra.mxu0 0.0
        %223 = vmatprep.subr.mxu0 0.0
        %224 = vmatpush1.msra.mxu0 0.0
        %225 = vmatprep.subr.mxu0 0.0
        %226 = vmatpush1.msra.mxu0 0.0
        %227 = vmatprep.subr.mxu0 0.0
        %228 = vmatpush1.msra.mxu0 0.0
        %229 = vmatprep.subr.mxu0 0.0
        %230 = vmatpush1.msra.mxu0 0.0
        %231 = vmatprep.subr.mxu0 0.0
        %232 = vmatpush1.msra.mxu0 0.0
        %233 = vmatprep.subr.mxu0 0.0
        %234 = vmatpush1.msra.mxu0 0.0
        %235 = vmatprep.subr.mxu0 0.0
        %236 = vmatpush1.msra.mxu0 0.0
        %237 = vmatprep.subr.mxu0 0.0
        %238 = vmatpush1.msra.mxu0 0.0
        %239 = vmatprep.subr.mxu0 0.0
        %240 = vmatpush1.msra.mxu0 0.0
        %241 = vmatprep.subr.mxu0 0.0
        %242 = vmatpush1.msra.mxu0 0.0
        %243 = vmatprep.subr.mxu0 0.0
        %244 = vmatpush1.msra.mxu0 0.0
        %245 = vmatprep.subr.mxu0 0.0
        %246 = vmatpush1.msra.mxu0 0.0
        %247 = vmatprep.subr.mxu0 0.0
        %248 = vmatpush1.msra.mxu0 0.0
        %249 = vmatprep.subr.mxu0 0.0
        %250 = vmatpush1.msra.mxu0 0.0
        %251 = vmatprep.subr.mxu0 0.0
        %252 = vmatpush1.msra.mxu0 0.0
        %253 = vmatprep.subr.mxu0 0.0
        %254 = vmatpush1.msra.mxu0 0.0
        %255 = vmatprep.subr.mxu0 0.0
        %256 = vmatpush1.msra.mxu0 0.0
        %257 = vmatprep.subr.mxu0 0.0
        %258 = vmatpush1.msra.mxu0 0.0
        %259 = vmatprep.subr.mxu0 0.0
        %260 = vmatpush1.msra.mxu0 0.0
        %261 = vmatprep.subr.mxu0 0.0
        %262 = vmatpush1.msra.mxu0 0.0
        %263 = vmatprep.subr.mxu0 0.0
        %264 = vmatpush1.msra.mxu0 0.0
        %265 = vmatprep.subr.mxu0 0.0
        %266 = vmatpush1.msra.mxu0 0.0
        %267 = vmatprep.subr.mxu0 0.0
        %268 = vmatpush1.msra.mxu0 0.0
        %269 = vmatprep.subr.mxu0 0.0
        %270 = vmatpush1.msra.mxu0 0.0
        %271 = vmatprep.subr.mxu0 0.0
        %272 = vmatpush1.msra.mxu0 0.0
        %273 = vmatprep.subr.mxu0 0.0
        %274 = vmatpush1.msra.mxu0 0.0
        %275 = vmatprep.subr.mxu0 0.0
        %276 = vmatpush1.msra.mxu0 0.0
        %277 = vmatprep.subr.mxu0 0.0
        %278 = vmatpush1.msra.mxu0 0.0
        %279 = vmatprep.subr.mxu0 0.0
        %280 = vmatpush1.msra.mxu0 0.0
        %281 = vmatprep.mubr.f32.mxu0 0.0
        %282 = vmatmul.mubr.f32.gmra.mrb[0].mxu0 %v215
        %v283 = vpop.f32.mrb[0].mxu0
        %v284 = vadd.f32 0.0, %v283
        %v285 = vpop.f32.mrb[0].mxu0
        %286 = vdwg.mxu0
        %v287 = vxor.u32 %v284, 2147483648
        %v288 = vmul.f32 %v287, 1.442695
        %v289 = vpow.pop %v288
        %v290 = vadd.f32 %v289, 1.0
        %v291 = vrcp.pop %v290
        %v292 = vmul.f32 1.0, %v291
        %v293 = vmul.f32 %v284, %v292
        %v294 = vld [vmem:[%s2] sm:$0xf]
        %vm295 = vcmask 31744
        %v297 = vsel %vm295, %v293, 0
        %vm299 = vcmask 1043456
        %v301 = vsel %vm299, %v294, 0
        %303 = vmatprep.subr.mxu0 0.0
        %304 = vmatpush1.msra.mxu0 %v301
        %305 = vmatprep.subr.mxu0 0.0
        %306 = vmatpush1.msra.mxu0 0.0
        %307 = vmatprep.subr.mxu0 0.0
        %308 = vmatpush1.msra.mxu0 0.0
        %309 = vmatprep.subr.mxu0 0.0
        %310 = vmatpush1.msra.mxu0 0.0
        %311 = vmatprep.subr.mxu0 0.0
        %312 = vmatpush1.msra.mxu0 0.0
        %313 = vmatprep.subr.mxu0 0.0
        %314 = vmatpush1.msra.mxu0 0.0
        %315 = vmatprep.subr.mxu0 0.0
        %316 = vmatpush1.msra.mxu0 0.0
        %317 = vmatprep.subr.mxu0 0.0
        %318 = vmatpush1.msra.mxu0 0.0
        %319 = vmatprep.subr.mxu0 0.0
        %320 = vmatpush1.msra.mxu0 0.0
        %321 = vmatprep.subr.mxu0 0.0
        %322 = vmatpush1.msra.mxu0 0.0
        %323 = vmatprep.subr.mxu0 0.0
        %324 = vmatpush1.msra.mxu0 0.0
        %325 = vmatprep.subr.mxu0 0.0
        %326 = vmatpush1.msra.mxu0 0.0
        %327 = vmatprep.subr.mxu0 0.0
        %328 = vmatpush1.msra.mxu0 0.0
        %329 = vmatprep.subr.mxu0 0.0
        %330 = vmatpush1.msra.mxu0 0.0
        %331 = vmatprep.subr.mxu0 0.0
        %332 = vmatpush1.msra.mxu0 0.0
        %333 = vmatprep.subr.mxu0 0.0
        %334 = vmatpush1.msra.mxu0 0.0
        %335 = vmatprep.subr.mxu0 0.0
        %336 = vmatpush1.msra.mxu0 0.0
        %337 = vmatprep.subr.mxu0 0.0
        %338 = vmatpush1.msra.mxu0 0.0
        %339 = vmatprep.subr.mxu0 0.0
        %340 = vmatpush1.msra.mxu0 0.0
        %341 = vmatprep.subr.mxu0 0.0
        %342 = vmatpush1.msra.mxu0 0.0
        %343 = vmatprep.subr.mxu0 0.0
        %344 = vmatpush1.msra.mxu0 0.0
        %345 = vmatprep.subr.mxu0 0.0
        %346 = vmatpush1.msra.mxu0 0.0
        %347 = vmatprep.subr.mxu0 0.0
        %348 = vmatpush1.msra.mxu0 0.0
        %349 = vmatprep.subr.mxu0 0.0
        %350 = vmatpush1.msra.mxu0 0.0
        %351 = vmatprep.subr.mxu0 0.0
        %352 = vmatpush1.msra.mxu0 0.0
        %353 = vmatprep.subr.mxu0 0.0
        %354 = vmatpush1.msra.mxu0 0.0
        %355 = vmatprep.subr.mxu0 0.0
        %356 = vmatpush1.msra.mxu0 0.0
        %357 = vmatprep.subr.mxu0 0.0
        %358 = vmatpush1.msra.mxu0 0.0
        %359 = vmatprep.subr.mxu0 0.0
        %360 = vmatpush1.msra.mxu0 0.0
        %361 = vmatprep.subr.mxu0 0.0
        %362 = vmatpush1.msra.mxu0 0.0
        %363 = vmatprep.subr.mxu0 0.0
        %364 = vmatpush1.msra.mxu0 0.0
        %365 = vmatprep.subr.mxu0 0.0
        %366 = vmatpush1.msra.mxu0 0.0
        %367 = vmatprep.mubr.f32.mxu0 0.0
        %368 = vmatmul.mubr.f32.gmra.mrb[0].mxu0 %v297
        %v369 = vpop.f32.mrb[0].mxu0
        %v370 = vadd.f32 0.0, %v369
        %v371 = vpop.f32.mrb[0].mxu0
        %372 = vdwg.mxu0
        %v373 = vxor.u32 %v370, 2147483648
        %v374 = vmul.f32 %v373, 1.442695
        %v375 = vpow.pop %v374
        %v376 = vadd.f32 %v375, 1.0
        %v377 = vrcp.pop %v376
        %v378 = vmul.f32 1.0, %v377
        %v379 = vlaneseq
        %v380 = vshrl.u32 %v379, 7
        %v381 = vsub.s32 0, %v380
        %v382 = vrot.slane %v378, %v381
        %384 = vbcast.lane.b32.xlu0 %v382, 256
        %v385 = vpop.permute.xlu0 %384
        %v386 = vlaneseq
        %v387 = vshrl.u32 %v386, 7
        %v388 = vsub.s32 1, %v387
        %v389 = vrot.slane %v378, %v388
        %391 = vbcast.lane.b32.xlu0 %v389, 256
        %v392 = vpop.permute.xlu0 %391
        %v393 = vmul.f32 %v191, %v385
        %v394 = vmul.f32 %v192, %v392
        %395 = vst [vmem:[%s188] sm:$0xff] %v393
        %396 = vst [vmem:[%s188 + $0x8] sm:$0xff] %v394
        %s397 = sand.u32 %s96, 1
        %s398 = scalar_lea.sflag [#allocation4], %s397
        %s399 = sand.u32 %s96, 1
        %s400 = smul.addr %s399, 16
        %s401 = scalar_lea.vmem [#allocation5], %s400
        // Predicated region
        $region37: #{tpu_custom_call.1} parent=31 // pred_check
          %p402 = pneg %p106
        $region38: #{tpu_custom_call.1} parent=31 // pred_check_branch
          %404 = sbr.rel (%p402) target = $region40
        $region39: #{tpu_custom_call.1} parent=31 // pred_region
          %s405 = smul.u32 2, %s20
          %s407 = ssub.s32 256, 256
          %408 = vsyncadd %s398, %s407
          %s409 = smul.addr %s405, 128
          %s410 = scalar_lea.hbm %s3, %s409
          %s411 = sshll.u32 %s401, 4
          %s412 = int_to_ptr.vmem [resolvable:$true] %s411
          %417 = dma.vmem_to_hbm [thread:$0]  %s412, 256, %s410, %s398, 128, 128, 8
        $region40: #{tpu_custom_call.1} parent=31 // pred_fallthru
          _
      $region32: #{tpu_custom_call.1} parent=5 // pred_fallthru
        _
      %p418 = scmp.le.s32.totalorder 2, %s15
      // Predicated region
      $region41: #{tpu_custom_call.1} parent=5 // pred_check
        %p419 = pneg %p418
      $region42: #{tpu_custom_call.1} parent=5 // pred_check_branch
        %421 = sbr.rel (%p419) target = $region44
      $region43: #{tpu_custom_call.1} parent=5 // pred_region
        %s422 = ssub.s32 %s15, 2
        // Predicated region
        $region45: #{tpu_custom_call.1} parent=43 // pred_check
          %p423 = pneg %p112
        $region46: #{tpu_custom_call.1} parent=43 // pred_check_branch
          %425 = sbr.rel (%p423) target = $region48
        $region47: #{tpu_custom_call.1} parent=43 // pred_region
          %s426 = sand.u32 %s97, 1
          %s427 = scalar_lea.sflag [#allocation4], %s426
          %s428 = sand.u32 %s97, 1
          %s429 = smul.addr %s428, 16
          %s430 = scalar_lea.vmem [#allocation5], %s429
          %431 = dma.done %s427, 256
        $region48: #{tpu_custom_call.1} parent=43 // pred_fallthru
          _
      $region44: #{tpu_custom_call.1} parent=5 // pred_fallthru
        _
    $region6: #{tpu_custom_call.1} parent=1 // loop_footer
      %s19 = sadd.s32 1, %s15
    $region7: #{tpu_custom_call.1} parent=1 // loop_footer_branch
      %14 = sbr.rel target = $region3
    $region8: #{tpu_custom_call.1} parent=1 // loop_exit
      _
    %432 = vsyncpa [#allocation3], 1
    %s433 = scalar_lea.sflag [#allocation3], 1
    %434 = vsyncpa %s433, 1
    %435 = vsyncpa [#allocation4], 1
    %s436 = scalar_lea.sflag [#allocation4], 1
    %437 = vsyncpa %s436, 1

</llo_original>
